<compile_context>
chip_gen: v5e
topology: v5e:2x2
jax: 0.10.0
libtpu: 0.0.40
codegen_flags: <defaults>
</compile_context>

<pallas_src>
import jax
import jax.numpy as jnp
from jax import lax
from jax.experimental import pallas as pl
from jax.experimental.pallas import tpu as pltpu


def _fused_head_kernel(hidden_ref, mask_ref, labels_ref,
                       w_pool_ref, b_pool_ref, w_cls_ref, b_cls_ref,
                       km_ref, logits_ref, loss_ref):
    # ---- 1) knowledge-mask transform (single fused multiply-add, cast done in-kernel) ----
    m = mask_ref[...].astype(jnp.float32)
    km_ref[...] = m * 100000.0 - 100000.0             # == (1.0 - m) * -100000.0

    # ---- 2) CLS token + pooler: Linear(H,H) + tanh ---------------------------------------
    # CLS slice taken inside the kernel (no strided HBM copy materialized by XLA).
    # TODO(synk): training-mode Dropout(0.1) (pltpu.prng_random_bits) not emitted; eval = identity.
    hs = hidden_ref[...]                               # (B, S, H) — tiny, one VMEM block
    cls = hs[:, 0, :]                                  # (B, H)
    pooled = jnp.tanh(
        jnp.dot(cls, w_pool_ref[...], preferred_element_type=jnp.float32)
        + b_pool_ref[...])                             # (B, H)

    # ---- 3) classifier Linear(H, C), C small -> VPU multiply + XLU lane-reduce -----------
    # w_cls is (C, H) (PyTorch nn.Linear layout). A C-lane-wide MXU matmul wastes a full
    # MXU pass / MRF pop, so keep it on the VPU/XLU.
    logits = (jnp.sum(pooled[:, None, :] * w_cls_ref[...][None, :, :], axis=-1)
              + b_cls_ref[...])                        # (B, C)
    logits_ref[...] = logits

    # ---- 4) CrossEntropyLoss (mean) via log-softmax + label select (no one-hot input) ----
    # TODO(synk): stsb regression branch (num_labels == 1 -> MSELoss) not implemented.
    mx = jnp.max(logits, axis=-1, keepdims=True)
    z = logits - mx
    lse = jnp.log(jnp.sum(jnp.exp(z), axis=-1, keepdims=True))
    logprob = z - lse                                  # (B, C)
    col = lax.broadcasted_iota(jnp.int32, logits.shape, 1)
    picked = jnp.where(col == labels_ref[...], logprob, 0.0)
    nll = -jnp.sum(picked, axis=-1, keepdims=True)     # (B, 1)
    loss_ref[...] = jnp.sum(nll, axis=0, keepdims=True) / nll.shape[0]   # (1, 1)


_VMEM = pl.BlockSpec(memory_space=pltpu.MemorySpace.VMEM)


def sequence_classification_forward(last_hidden_states, knowledge_mask, labels, params):
    """Post-encoder part of SequenceClassificationModel.forward as one fused pallas_call.

    last_hidden_states: (B, S, H) f32  — sent_model encoder output (external module)
    knowledge_mask:     (B, K)    {0,1} float mask
    labels:             (B,)      int
    params: w_pool (H,H) [x@W layout], b_pool (1,H), w_cls (C,H) [PyTorch layout], b_cls (1,C)
    """
    B = last_hidden_states.shape[0]
    K = knowledge_mask.shape[1]
    C = params["w_cls"].shape[0]

    km, logits, loss = pl.pallas_call(
        _fused_head_kernel,
        out_shape=(
            jax.ShapeDtypeStruct((B, K), jnp.float32),   # transformed knowledge_mask
            jax.ShapeDtypeStruct((B, C), jnp.float32),   # logits
            jax.ShapeDtypeStruct((1, 1), jnp.float32),   # loss (VMEM (1,1) for robust lowering)
        ),
        in_specs=[_VMEM] * 7,
        out_specs=(_VMEM, _VMEM, _VMEM),
    )(last_hidden_states,
      knowledge_mask,
      labels.reshape(B, 1).astype(jnp.int32),
      params["w_pool"], params["b_pool"], params["w_cls"], params["b_cls"])

    return {"loss": loss[0, 0], "logits": logits, "knowledge_mask": km}


if __name__ == "__main__":
    batch, seq, hidden, num_labels, n_knowledge = 4, 8, 32, 4, 16

    key = jax.random.PRNGKey(0)
    k_hs, k_mask, k_lab, k_w1, k_b1, k_w2, k_b2 = jax.random.split(key, 7)

    # Synthetic sent_model encoder output (pretrained transformer stack not re-implemented).
    last_hidden_states = jax.random.normal(k_hs, (batch, seq, hidden), jnp.float32)
    knowledge_mask = jax.random.bernoulli(
        k_mask, 0.5, (batch, n_knowledge)).astype(jnp.float32)
    labels = jax.random.randint(k_lab, (batch,), 0, num_labels, dtype=jnp.int32)

    params = {
        "w_pool": jax.random.normal(k_w1, (hidden, hidden), jnp.float32) * 0.05,
        "b_pool": jax.random.normal(k_b1, (1, hidden), jnp.float32) * 0.01,
        "w_cls":  jax.random.normal(k_w2, (num_labels, hidden), jnp.float32) * 0.05,
        "b_cls":  jax.random.normal(k_b2, (1, num_labels), jnp.float32) * 0.01,
    }

    out = sequence_classification_forward(last_hidden_states, knowledge_mask, labels, params)
    jax.block_until_ready(out)

    # ---- reference check in plain JAX ----------------------------------------------------
    cls = last_hidden_states[:, 0, :]
    pooled = jnp.tanh(cls @ params["w_pool"] + params["b_pool"])
    ref_logits = pooled @ params["w_cls"].T + params["b_cls"]
    ref_loss = -jnp.mean(jnp.take_along_axis(jax.nn.log_softmax(ref_logits, axis=-1),
                                             labels[:, None], axis=-1))
    ref_km = (1.0 - knowledge_mask) * -100000.0

    assert jnp.allclose(out["logits"], ref_logits, atol=1e-4, rtol=1e-4)
    assert jnp.allclose(out["loss"], ref_loss, atol=1e-4, rtol=1e-4)
    assert jnp.allclose(out["knowledge_mask"], ref_km)
    print("KERNEL_OK")
</pallas_src>

<mosaic_0001>
module attributes {stable_mosaic.version = 11 : i64} {
  func.func @_fused_head_kernel(%arg0: memref<4x8x32xf32, #tpu.memory_space<vmem>>, %arg1: memref<4x16xf32, #tpu.memory_space<vmem>>, %arg2: memref<4x1xi32, #tpu.memory_space<vmem>>, %arg3: memref<32x32xf32, #tpu.memory_space<vmem>>, %arg4: memref<1x32xf32, #tpu.memory_space<vmem>>, %arg5: memref<4x32xf32, #tpu.memory_space<vmem>>, %arg6: memref<1x4xf32, #tpu.memory_space<vmem>>, %arg7: memref<4x16xf32, #tpu.memory_space<vmem>>, %arg8: memref<4x4xf32, #tpu.memory_space<vmem>>, %arg9: memref<1x1xf32, #tpu.memory_space<vmem>>) attributes {dimension_semantics = [], scalar_prefetch = 0 : i64, scratch_operands = 0 : i64, tpu.core_type = #tpu.core_type<tc>} {
    %c0 = arith.constant 0 : index
    %c0_0 = arith.constant 0 : index
    %0 = vector.load %arg1[%c0, %c0_0] : memref<4x16xf32, #tpu.memory_space<vmem>>, vector<4x16xf32>
    %cst = arith.constant 1.000000e+05 : f32
    %1 = vector.broadcast %cst : f32 to vector<4x16xf32>
    %2 = arith.mulf %0, %1 : vector<4x16xf32>
    %cst_1 = arith.constant 1.000000e+05 : f32
    %3 = vector.broadcast %cst_1 : f32 to vector<4x16xf32>
    %4 = arith.subf %2, %3 : vector<4x16xf32>
    %c0_2 = arith.constant 0 : index
    %c0_3 = arith.constant 0 : index
    %5 = vector.load %arg7[%c0_2, %c0_3] : memref<4x16xf32, #tpu.memory_space<vmem>>, vector<4x16xf32>
    tpu.vector_store %arg7[%c0_2, %c0_3], %4 {strides = array<i32>} : memref<4x16xf32, #tpu.memory_space<vmem>>, vector<4x16xf32>,
    %c0_4 = arith.constant 0 : index
    %c0_5 = arith.constant 0 : index
    %c0_6 = arith.constant 0 : index
    %6 = vector.load %arg0[%c0_4, %c0_5, %c0_6] : memref<4x8x32xf32, #tpu.memory_space<vmem>>, vector<4x8x32xf32>
    %7 = vector.extract_strided_slice %6 {offsets = [0, 0, 0], sizes = [4, 1, 32], strides = [1, 1, 1]} : vector<4x8x32xf32> to vector<4x1x32xf32>
    %8 = vector.shape_cast %7 : vector<4x1x32xf32> to vector<4x32xf32>
    %c0_7 = arith.constant 0 : index
    %c0_8 = arith.constant 0 : index
    %9 = vector.load %arg3[%c0_7, %c0_8] : memref<32x32xf32, #tpu.memory_space<vmem>>, vector<32x32xf32>
    %cst_9 = arith.constant dense<0.000000e+00> : vector<4x32xf32>
    %10 = tpu.matmul %8, %9, %cst_9 {dimension_numbers = #tpu.dot_dimension_numbers<[1], [0], [0], [1], [0, 0, 1, 1], [], []>} : vector<4x32xf32>, vector<32x32xf32>, vector<4x32xf32> -> vector<4x32xf32>
    %c0_10 = arith.constant 0 : index
    %c0_11 = arith.constant 0 : index
    %11 = vector.load %arg4[%c0_10, %c0_11] : memref<1x32xf32, #tpu.memory_space<vmem>>, vector<1x32xf32>
    %12 = vector.broadcast %11 : vector<1x32xf32> to vector<4x32xf32>
    %13 = arith.addf %10, %12 : vector<4x32xf32>
    %14 = math.tanh %13 : vector<4x32xf32>
    %15 = vector.shape_cast %14 : vector<4x32xf32> to vector<4x1x32xf32>
    %c0_12 = arith.constant 0 : index
    %c0_13 = arith.constant 0 : index
    %16 = vector.load %arg5[%c0_12, %c0_13] : memref<4x32xf32, #tpu.memory_space<vmem>>, vector<4x32xf32>
    %17 = vector.shape_cast %16 : vector<4x32xf32> to vector<1x4x32xf32>
    %18 = vector.broadcast %15 : vector<4x1x32xf32> to vector<4x4x32xf32>
    %19 = vector.broadcast %17 : vector<1x4x32xf32> to vector<4x4x32xf32>
    %20 = arith.mulf %18, %19 : vector<4x4x32xf32>
    %cst_14 = arith.constant dense<0.000000e+00> : vector<4x4xf32>
    %21 = vector.multi_reduction <add>, %20, %cst_14 [2] : vector<4x4x32xf32> to vector<4x4xf32>
    %c0_15 = arith.constant 0 : index
    %c0_16 = arith.constant 0 : index
    %22 = vector.load %arg6[%c0_15, %c0_16] : memref<1x4xf32, #tpu.memory_space<vmem>>, vector<1x4xf32>
    %23 = vector.broadcast %22 : vector<1x4xf32> to vector<4x4xf32>
    %24 = arith.addf %21, %23 : vector<4x4xf32>
    %c0_17 = arith.constant 0 : index
    %c0_18 = arith.constant 0 : index
    %25 = vector.load %arg8[%c0_17, %c0_18] : memref<4x4xf32, #tpu.memory_space<vmem>>, vector<4x4xf32>
    tpu.vector_store %arg8[%c0_17, %c0_18], %24 {strides = array<i32>} : memref<4x4xf32, #tpu.memory_space<vmem>>, vector<4x4xf32>,
    %cst_19 = arith.constant dense<0xFF800000> : vector<4xf32>
    %26 = vector.multi_reduction <maximumf>, %24, %cst_19 [1] : vector<4x4xf32> to vector<4xf32>
    %27 = vector.shape_cast %26 : vector<4xf32> to vector<4x1xf32>
    %28 = vector.broadcast %27 : vector<4x1xf32> to vector<4x4xf32>
    %29 = arith.subf %24, %28 : vector<4x4xf32>
    %30 = math.exp %29 : vector<4x4xf32>
    %cst_20 = arith.constant dense<0.000000e+00> : vector<4xf32>
    %31 = vector.multi_reduction <add>, %30, %cst_20 [1] : vector<4x4xf32> to vector<4xf32>
    %32 = vector.shape_cast %31 : vector<4xf32> to vector<4x1xf32>
    %33 = math.log %32 : vector<4x1xf32>
    %34 = vector.broadcast %33 : vector<4x1xf32> to vector<4x4xf32>
    %35 = arith.subf %29, %34 : vector<4x4xf32>
    %36 = tpu.iota {dimensions = array<i32: 1>} : vector<4x4xi32>
    %c0_21 = arith.constant 0 : index
    %c0_22 = arith.constant 0 : index
    %37 = vector.load %arg2[%c0_21, %c0_22] : memref<4x1xi32, #tpu.memory_space<vmem>>, vector<4x1xi32>
    %38 = vector.broadcast %37 : vector<4x1xi32> to vector<4x4xi32>
    %39 = arith.cmpi eq, %36, %38 : vector<4x4xi32>
    %cst_23 = arith.constant 0.000000e+00 : f32
    %40 = vector.broadcast %cst_23 : f32 to vector<4x4xf32>
    %41 = arith.select %39, %35, %40 : vector<4x4xi1>, vector<4x4xf32>
    %cst_24 = arith.constant dense<0.000000e+00> : vector<4xf32>
    %42 = vector.multi_reduction <add>, %41, %cst_24 [1] : vector<4x4xf32> to vector<4xf32>
    %43 = vector.shape_cast %42 : vector<4xf32> to vector<4x1xf32>
    %cst_25 = arith.constant 0.000000e+00 : f32
    %44 = vector.broadcast %cst_25 : f32 to vector<4x1xf32>
    %45 = arith.subf %44, %43 : vector<4x1xf32>
    %cst_26 = arith.constant dense<0.000000e+00> : vector<1xf32>
    %46 = vector.multi_reduction <add>, %45, %cst_26 [0] : vector<4x1xf32> to vector<1xf32>
    %47 = vector.shape_cast %46 : vector<1xf32> to vector<1x1xf32>
    %cst_27 = arith.constant 4.000000e+00 : f32
    %48 = vector.broadcast %cst_27 : f32 to vector<1x1xf32>
    %49 = arith.divf %47, %48 : vector<1x1xf32>
    %c0_28 = arith.constant 0 : index
    %c0_29 = arith.constant 0 : index
    %50 = vector.load %arg9[%c0_28, %c0_29] : memref<1x1xf32, #tpu.memory_space<vmem>>, vector<1x1xf32>
    tpu.vector_store %arg9[%c0_28, %c0_29], %49 {strides = array<i32>} : memref<1x1xf32, #tpu.memory_space<vmem>>, vector<1x1xf32>,
    return
  }
}

</mosaic_0001>

<llo_original>
// kernel: tpu_custom_call.1
$region0: #{tpu_custom_call.1}
  #allocation0 [shape = 'u32[]', space=smem, size = 0x4, offset = 0x4, fixed_abs, tag = 'smem constant byte address 0x4 - core index']
  #allocation1 [shape = 'u32[72,128]{1,0:T(1,128)}', space=vmem, size = 0x9000, scoped, tag = 'internal scratch']
  %s0 = inlined_call_operand.hbm [shape: f32[4,8,32], index: 0, kind: input, shape index: {}]
  %s1 = inlined_call_operand.vmem [shape: f32[4,16], index: 1, kind: input, shape index: {}]
  %s2 = inlined_call_operand.vmem [shape: s32[4,1], index: 2, kind: input, shape index: {}]
  %s3 = inlined_call_operand.hbm [shape: f32[32,32], index: 3, kind: input, shape index: {}]
  %s4 = inlined_call_operand.vmem [shape: f32[1,32], index: 4, kind: input, shape index: {}]
  %s5 = inlined_call_operand.hbm [shape: f32[4,32], index: 5, kind: input, shape index: {}]
  %s6 = inlined_call_operand.vmem [shape: f32[1,4], index: 6, kind: input, shape index: {}]
  %s7 = inlined_call_operand.hbm [shape: f32[4,16], index: 7, kind: output, shape index: {0}]
  %s8 = inlined_call_operand.hbm [shape: f32[4,4], index: 8, kind: output, shape index: {1}]
  %s9 = inlined_call_operand.hbm [shape: f32[1,1], index: 9, kind: output, shape index: {2}]
  %10 = xla_tuple %s7, %s8, %s9
  %s11 = sld [smem:[#allocation0]]
  $region66: #{tpu_custom_call.1} parent=0
    _
  %s13 = ssub.s32 1, %s11
  %s14 = scalar_select 0, %s13, %s11
  $region1: #{tpu_custom_call.1} parent=0
    #allocation2 [shape = 'u8[16384]{0}', space=vmem, size = 0x4000, scoped, tag = 'input window, operand 0, single buffered']
    #allocation3 [shape = 's32[1]{0}', space=sflag, size = 0x4, scoped, tag = 'scoped memory for tpu_custom_call.1']
    #allocation4 [shape = 's32[1]{0}', space=sflag, size = 0x4, scoped, tag = 'scoped memory for tpu_custom_call.1']
    #allocation5 [shape = 'u8[16384]{0}', space=vmem, size = 0x4000, scoped, tag = 'input window, operand 3, single buffered']
    #allocation6 [shape = 's32[1]{0}', space=sflag, size = 0x4, scoped, tag = 'scoped memory for tpu_custom_call.1']
    #allocation7 [shape = 'u8[2048]{0}', space=vmem, size = 0x800, scoped, tag = 'input window, operand 5, single buffered']
    #allocation8 [shape = 'u8[2048]{0}', space=vmem, size = 0x800, scoped, tag = 'output window, operand 0, single buffered']
    #allocation9 [shape = 'u8[2048]{0}', space=vmem, size = 0x800, scoped, tag = 'output window, operand 1, single buffered']
    #allocation10 [shape = 's32[1]{0}', space=sflag, size = 0x4, scoped, tag = 'scoped memory for tpu_custom_call.1']
    #allocation11 [shape = 'u8[512]{0}', space=vmem, size = 0x400, scoped, tag = 'output window, operand 2, single buffered']
    %15 = vsyncpa [#allocation3], 0
    %16 = vsyncpa [#allocation6], 0
    %17 = vsyncpa [#allocation4], 0
    %18 = vsyncpa [#allocation10], 0
    // Predicated region
    $region2: #{tpu_custom_call.1} parent=1 // pred_check
      _
    $region3: #{tpu_custom_call.1} parent=1 // pred_check_branch
      %20 = sbr.rel (0) target = $region5
    $region4: #{tpu_custom_call.1} parent=1 // pred_region
      %22 = vsyncadd [#allocation3], 0
      %s23 = sshll.u32 %s0, 4
      %s24 = int_to_ptr.hbm [resolvable:$true] %s23
      %s25 = sshll.u32 [#allocation2], 4
      %s26 = int_to_ptr.vmem [resolvable:$true] %s25
      %31 = dma.hbm_to_vmem [thread:$0]  %s24, 512, %s26, [#allocation3], 128, 128, 8
    $region5: #{tpu_custom_call.1} parent=1 // pred_fallthru
      _
    // Predicated region
    $region6: #{tpu_custom_call.1} parent=1 // pred_check
      _
    $region7: #{tpu_custom_call.1} parent=1 // pred_check_branch
      %33 = sbr.rel (0) target = $region9
    $region8: #{tpu_custom_call.1} parent=1 // pred_region
      _
    $region9: #{tpu_custom_call.1} parent=1 // pred_fallthru
      _
    // Predicated region
    $region10: #{tpu_custom_call.1} parent=1 // pred_check
      _
    $region11: #{tpu_custom_call.1} parent=1 // pred_check_branch
      %35 = sbr.rel (0) target = $region13
    $region12: #{tpu_custom_call.1} parent=1 // pred_region
      _
    $region13: #{tpu_custom_call.1} parent=1 // pred_fallthru
      _
    // Predicated region
    $region14: #{tpu_custom_call.1} parent=1 // pred_check
      _
    $region15: #{tpu_custom_call.1} parent=1 // pred_check_branch
      %37 = sbr.rel (0) target = $region17
    $region16: #{tpu_custom_call.1} parent=1 // pred_region
      %39 = vsyncadd [#allocation6], 0
      %s40 = sshll.u32 %s3, 4
      %s41 = int_to_ptr.hbm [resolvable:$true] %s40
      %s42 = sshll.u32 [#allocation5], 4
      %s43 = int_to_ptr.vmem [resolvable:$true] %s42
      %48 = dma.hbm_to_vmem [thread:$0]  %s41, 512, %s43, [#allocation6], 128, 128, 8
    $region17: #{tpu_custom_call.1} parent=1 // pred_fallthru
      _
    // Predicated region
    $region18: #{tpu_custom_call.1} parent=1 // pred_check
      _
    $region19: #{tpu_custom_call.1} parent=1 // pred_check_branch
      %50 = sbr.rel (0) target = $region21
    $region20: #{tpu_custom_call.1} parent=1 // pred_region
      _
    $region21: #{tpu_custom_call.1} parent=1 // pred_fallthru
      _
    // Predicated region
    $region22: #{tpu_custom_call.1} parent=1 // pred_check
      _
    $region23: #{tpu_custom_call.1} parent=1 // pred_check_branch
      %52 = sbr.rel (0) target = $region25
    $region24: #{tpu_custom_call.1} parent=1 // pred_region
      %54 = vsyncadd [#allocation6], 0
      %s56 = sshll.u32 %s5, 4
      %s57 = int_to_ptr.hbm [resolvable:$true] %s56
      %s58 = sshll.u32 [#allocation7], 4
      %s59 = int_to_ptr.vmem [resolvable:$true] %s58
      %61 = dma.hbm_to_vmem [thread:$0]  %s57, 64, %s59, [#allocation6]
    $region25: #{tpu_custom_call.1} parent=1 // pred_fallthru
      _
    // Predicated region
    $region26: #{tpu_custom_call.1} parent=1 // pred_check
      _
    $region27: #{tpu_custom_call.1} parent=1 // pred_check_branch
      %63 = sbr.rel (0) target = $region29
    $region28: #{tpu_custom_call.1} parent=1 // pred_region
      _
    $region29: #{tpu_custom_call.1} parent=1 // pred_fallthru
      _
    // Predicated region
    $region30: #{tpu_custom_call.1} parent=1 // pred_check
      _
    $region31: #{tpu_custom_call.1} parent=1 // pred_check_branch
      %65 = sbr.rel (0) target = $region33
    $region32: #{tpu_custom_call.1} parent=1 // pred_region
      %67 = dma.done [#allocation3], 512
    $region33: #{tpu_custom_call.1} parent=1 // pred_fallthru
      _
    // Predicated region
    $region34: #{tpu_custom_call.1} parent=1 // pred_check
      _
    $region35: #{tpu_custom_call.1} parent=1 // pred_check_branch
      %69 = sbr.rel (0) target = $region37
    $region36: #{tpu_custom_call.1} parent=1 // pred_region
      %71 = dma.done [#allocation6], 512
    $region37: #{tpu_custom_call.1} parent=1 // pred_fallthru
      _
    // Predicated region
    $region38: #{tpu_custom_call.1} parent=1 // pred_check
      _
    $region39: #{tpu_custom_call.1} parent=1 // pred_check_branch
      %73 = sbr.rel (0) target = $region41
    $region40: #{tpu_custom_call.1} parent=1 // pred_region
      %75 = dma.done [#allocation6], 64
    $region41: #{tpu_custom_call.1} parent=1 // pred_fallthru
      _
    %v76 = vld [vmem:[%s1] sm:$0xf]
    %v77 = vmul.f32 %v76, 100000.0
    %v78 = vsub.f32 %v77, 100000.0
    %vm79 = vcmask 125952
    %80 = vst.msk [vmem:[#allocation8] sm:$0xf] %vm79, %v78
    %v81 = vld [vmem:[#allocation2] sm:$0xff]
    %v82 = vld [vmem:[#allocation2 + $0x8] sm:$0xff]
    %v83 = vld [vmem:[#allocation2 + $0x10] sm:$0xff]
    %v84 = vld [vmem:[#allocation2 + $0x18] sm:$0xff]
    %v85 = vld [vmem:[#allocation5] sm:$0xff]
    %v86 = vld [vmem:[#allocation5 + $0x8] sm:$0xff]
    %v87 = vld [vmem:[#allocation5 + $0x10] sm:$0xff]
    %v88 = vld [vmem:[#allocation5 + $0x18] sm:$0xff]
    %v89 = vld [vmem:[%s4] sm:$0x1]
    %v91 = vperm.slane %v89, 0
    %v97 = vrot.slane %v82, 7
    %vm98 = vcmask 1041409
    %v99 = vsel %vm98, %v97, %v81
    %v100 = vrot.slane %v83, 6
    %vm101 = vcmask 1042434
    %v102 = vsel %vm101, %v100, %v99
    %v103 = vrot.slane %v84, 5
    %vm104 = vcmask 1043459
    %v105 = vsel %vm104, %v103, %v102
    %vm106 = vcmask 261120
    %v107 = vsel %vm106, %v105, 0
    %109 = vmatpush.msra.mxu0 0.0
    %110 = vmatpush.msra.mxu0 0.0
    %111 = vmatpush.msra.mxu0 0.0
    %112 = vmatpush.msra.mxu0 0.0
    %113 = vmatpush.msra.mxu0 0.0
    %114 = vmatpush.msra.mxu0 0.0
    %115 = vmatpush.msra.mxu0 0.0
    %116 = vmatpush.msra.mxu0 0.0
    %117 = vmatpush.msra.mxu0 0.0
    %118 = vmatpush.msra.mxu0 0.0
    %119 = vmatpush.msra.mxu0 0.0
    %120 = vmatpush.msra.mxu0 0.0
    %121 = vmatpush.msra.mxu0 %v88
    %122 = vmatpush.msra.mxu0 %v87
    %123 = vmatpush.msra.mxu0 %v86
    %124 = vmatpush.msra.mxu0 %v85
    %125 = vmatmul.f32.gmra.mxu0 %v107
    %v126 = vpop.f32.mrf.mxu0
    %v127 = vadd.f32 %v91, %v126
    %128 = vdwg.mxu0
    %v129 = vtanh.pop %v127
    %v131 = vrot.slane %v129, 1
    %v132 = vrot.slane %v129, 2
    %v133 = vrot.slane %v129, 3
    %v134 = vld [vmem:[#allocation7] sm:$0xf]
    %v135 = vperm.slane %v129, 0
    %v136 = vperm.slane %v131, 0
    %v137 = vperm.slane %v132, 0
    %v138 = vperm.slane %v133, 0
    %v143 = vmul.f32 %v135, %v134
    %v144 = vmul.f32 %v136, %v134
    %v145 = vmul.f32 %v137, %v134
    %v146 = vmul.f32 %v138, %v134
    %vm147 = vcmask 257024
    %v148 = vsel %vm147, %v143, 0.0
    %149 = vadd.xlane.f32.xlu0 %v148
    %v150 = vpop.xlane.xlu0 %149
    %v151 = vsel %vm147, %v144, 0.0
    %152 = vadd.xlane.f32.xlu0 %v151
    %v153 = vpop.xlane.xlu0 %152
    %v154 = vsel %vm147, %v145, 0.0
    %155 = vadd.xlane.f32.xlu0 %v154
    %v156 = vpop.xlane.xlu0 %155
    %v157 = vsel %vm147, %v146, 0.0
    %158 = vadd.xlane.f32.xlu0 %v157
    %v159 = vpop.xlane.xlu0 %158
    %v160 = vld [vmem:[%s6] sm:$0x1]
    %v162 = vperm.slane %v160, 0
    %v163 = vlaneseq
    %v164 = vshrl.u32 %v163, 7
    %166 = vset.pattern.permute.xlu0 %v164
    %167 = vperm.xlu0 %166, %v162
    %v168 = vpop.permute.xlu0 %167
    %v170 = vadd.f32 %v150, %v168
    %v171 = vadd.f32 %v153, %v168
    %v172 = vadd.f32 %v156, %v168
    %v173 = vadd.f32 %v159, %v168
    %178 = vset.pattern.permute.xlu0 0
    %179 = vperm.xlu0 %178, %v170
    %v180 = vpop.permute.xlu0 %179
    %181 = vset.pattern.permute.xlu0 0
    %182 = vperm.xlu0 %181, %v171
    %v183 = vpop.permute.xlu0 %182
    %184 = vset.pattern.permute.xlu0 0
    %185 = vperm.xlu0 %184, %v172
    %v186 = vpop.permute.xlu0 %185
    %187 = vset.pattern.permute.xlu0 0
    %188 = vperm.xlu0 %187, %v173
    %v189 = vpop.permute.xlu0 %188
    %v190 = vlaneseq
    %v191 = vand.u32 %v190, 127
    %v192 = vperm.slane %v180, %v191
    %v193 = vperm.slane %v183, %v191
    %v194 = vperm.slane %v186, %v191
    %v195 = vperm.slane %v189, %v191
    %v196 = vsel %vm98, %v193, %v192
    %v197 = vsel %vm101, %v194, %v196
    %v198 = vsel %vm104, %v195, %v197
    %vm200 = vcmask 27648
    %201 = vst.msk [vmem:[#allocation9] sm:$0xf] %vm200, %v198
    %v202 = vsel %vm200, %v198, -inf
    %203 = vmax.xlane.f32.xlu0 %v202
    %v204 = vpop.xlane.xlu0 %203
    %v206 = vperm.slane %v204, 0
    %v207 = vperm.slane %v204, 1
    %v208 = vperm.slane %v204, 2
    %v209 = vperm.slane %v204, 3
    %v214 = vsub.f32 %v170, %v206
    %v215 = vsub.f32 %v171, %v207
    %v216 = vsub.f32 %v172, %v208
    %v217 = vsub.f32 %v173, %v209
    %v218 = vmul.f32 %v214, 1.442695
    %v219 = vpow.pop %v218
    %v220 = vmul.f32 %v215, 1.442695
    %v221 = vpow.pop %v220
    %v222 = vmul.f32 %v216, 1.442695
    %v223 = vpow.pop %v222
    %v224 = vmul.f32 %v217, 1.442695
    %v225 = vpow.pop %v224
    %230 = vset.pattern.permute.xlu0 0
    %231 = vperm.xlu0 %230, %v219
    %v232 = vpop.permute.xlu0 %231
    %233 = vset.pattern.permute.xlu0 0
    %234 = vperm.xlu0 %233, %v221
    %v235 = vpop.permute.xlu0 %234
    %236 = vset.pattern.permute.xlu0 0
    %237 = vperm.xlu0 %236, %v223
    %v238 = vpop.permute.xlu0 %237
    %239 = vset.pattern.permute.xlu0 0
    %240 = vperm.xlu0 %239, %v225
    %v241 = vpop.permute.xlu0 %240
    %v242 = vperm.slane %v232, %v191
    %v243 = vperm.slane %v235, %v191
    %v244 = vperm.slane %v238, %v191
    %v245 = vperm.slane %v241, %v191
    %v246 = vsel %vm98, %v243, %v242
    %v247 = vsel %vm101, %v244, %v246
    %v248 = vsel %vm104, %v245, %v247
    %v250 = vsel %vm200, %v248, 0.0
    %251 = vadd.xlane.f32.xlu0 %v250
    %v252 = vpop.xlane.xlu0 %251
    %v253 = vlog2.pop %v252
    %v254 = vmul.f32 %v253, 0.6931472
    %v256 = vperm.slane %v254, 0
    %v257 = vperm.slane %v254, 1
    %v258 = vperm.slane %v254, 2
    %v259 = vperm.slane %v254, 3
    %v264 = vsub.f32 %v214, %v256
    %v265 = vsub.f32 %v215, %v257
    %v266 = vsub.f32 %v216, %v258
    %v267 = vsub.f32 %v217, %v259
    %v268 = vld [vmem:[%s2] sm:$0xf]
    %269 = vset.pattern.permute.xlu0 0
    %270 = vperm.xlu0 %269, %v268
    %v271 = vpop.permute.xlu0 %270
    %vm272 = vcmp.eq.s32.totalorder %v191, %v271
    %277 = vset.pattern.permute.xlu0 0
    %278 = vperm.xlu0 %277, %v264
    %v279 = vpop.permute.xlu0 %278
    %280 = vset.pattern.permute.xlu0 0
    %281 = vperm.xlu0 %280, %v265
    %v282 = vpop.permute.xlu0 %281
    %283 = vset.pattern.permute.xlu0 0
    %284 = vperm.xlu0 %283, %v266
    %v285 = vpop.permute.xlu0 %284
    %286 = vset.pattern.permute.xlu0 0
    %287 = vperm.xlu0 %286, %v267
    %v288 = vpop.permute.xlu0 %287
    %v289 = vperm.slane %v279, %v191
    %v290 = vperm.slane %v282, %v191
    %v291 = vperm.slane %v285, %v191
    %v292 = vperm.slane %v288, %v191
    %v293 = vsel %vm98, %v290, %v289
    %v294 = vsel %vm101, %v291, %v293
    %v295 = vsel %vm104, %v292, %v294
    %v297 = vsel %vm272, %v295, 0.0
    %v298 = vsel %vm200, %v297, 0.0
    %299 = vadd.xlane.f32.xlu0 %v298
    %v300 = vpop.xlane.xlu0 %299
    %v301 = vsub.f32 0.0, %v300
    %vm302 = vcmask 1043456
    %v303 = vsel %vm302, %v301, 0.0
    %v304 = vrot.slane %v303, 4
    %v305 = vadd.f32 %v303, %v304
    %v306 = vrot.slane %v305, 2
    %v307 = vadd.f32 %v305, %v306
    %v308 = vrot.slane %v307, 1
    %v309 = vadd.f32 %v307, %v308
    %v310 = vrcp.pop 4.0
    %v311 = vmul.f32 4.0, %v310
    %v312 = vsub.f32 1.0, %v311
    %v313 = vmul.f32 %v310, %v312
    %v314 = vadd.f32 %v310, %v313
    %vm315 = vweird.f32 %v310
    %v316 = vsel %vm315, %v310, %v314
    %v317 = vmul.f32 %v309, %v316
    %vm318 = vcmask 0
    %319 = vst.msk [vmem:[#allocation11] sm:$0x1] %vm318, %v317
    // Predicated region
    $region42: #{tpu_custom_call.1} parent=1 // pred_check
      _
    $region43: #{tpu_custom_call.1} parent=1 // pred_check_branch
      %321 = sbr.rel (0) target = $region45
    $region44: #{tpu_custom_call.1} parent=1 // pred_region
      %323 = vsyncadd [#allocation4], 0
      %s325 = sshll.u32 [#allocation8], 4
      %s326 = int_to_ptr.vmem [resolvable:$true] %s325
      %s327 = sshll.u32 %s7, 4
      %s328 = int_to_ptr.hbm [resolvable:$true] %s327
      %330 = dma.vmem_to_hbm [thread:$0]  %s326, 64, %s328, [#allocation4]
    $region45: #{tpu_custom_call.1} parent=1 // pred_fallthru
      _
    // Predicated region
    $region46: #{tpu_custom_call.1} parent=1 // pred_check
      _
    $region47: #{tpu_custom_call.1} parent=1 // pred_check_branch
      %332 = sbr.rel (0) target = $region49
    $region48: #{tpu_custom_call.1} parent=1 // pred_region
      %334 = vsyncadd [#allocation10], 0
      %s336 = sshll.u32 [#allocation9], 4
      %s337 = int_to_ptr.vmem [resolvable:$true] %s336
      %s338 = sshll.u32 %s8, 4
      %s339 = int_to_ptr.hbm [resolvable:$true] %s338
      %341 = dma.vmem_to_hbm [thread:$0]  %s337, 64, %s339, [#allocation10]
    $region49: #{tpu_custom_call.1} parent=1 // pred_fallthru
      _
    // Predicated region
    $region50: #{tpu_custom_call.1} parent=1 // pred_check
      _
    $region51: #{tpu_custom_call.1} parent=1 // pred_check_branch
      %343 = sbr.rel (0) target = $region53
    $region52: #{tpu_custom_call.1} parent=1 // pred_region
      %345 = vsyncadd [#allocation10], 0
      %s347 = sshll.u32 [#allocation11], 4
      %s348 = int_to_ptr.vmem [resolvable:$true] %s347
      %s349 = sshll.u32 %s9, 4
      %s350 = int_to_ptr.hbm [resolvable:$true] %s349
      %352 = dma.vmem_to_hbm [thread:$0]  %s348, 16, %s350, [#allocation10]
    $region53: #{tpu_custom_call.1} parent=1 // pred_fallthru
      _
    // Predicated region
    $region54: #{tpu_custom_call.1} parent=1 // pred_check
      _
    $region55: #{tpu_custom_call.1} parent=1 // pred_check_branch
      %354 = sbr.rel (0) target = $region57
    $region56: #{tpu_custom_call.1} parent=1 // pred_region
      %356 = dma.done [#allocation4], 64
    $region57: #{tpu_custom_call.1} parent=1 // pred_fallthru
      _
    // Predicated region
    $region58: #{tpu_custom_call.1} parent=1 // pred_check
      _
    $region59: #{tpu_custom_call.1} parent=1 // pred_check_branch
      %358 = sbr.rel (0) target = $region61
    $region60: #{tpu_custom_call.1} parent=1 // pred_region
      %360 = dma.done [#allocation10], 64
    $region61: #{tpu_custom_call.1} parent=1 // pred_fallthru
      _
    // Predicated region
    $region62: #{tpu_custom_call.1} parent=1 // pred_check
      _
    $region63: #{tpu_custom_call.1} parent=1 // pred_check_branch
      %362 = sbr.rel (0) target = $region65
    $region64: #{tpu_custom_call.1} parent=1 // pred_region
      %364 = dma.done [#allocation10], 16
    $region65: #{tpu_custom_call.1} parent=1 // pred_fallthru
      _
    %365 = vsyncpa [#allocation3], 1
    %366 = vsyncpa [#allocation6], 1
    %367 = vsyncpa [#allocation4], 1
    %368 = vsyncpa [#allocation10], 1

</llo_original>
